<compile_context>
chip_gen: v7x
topology: tpu7x:2x2x1
jax: 0.10.0
libtpu: 0.0.40
codegen_flags: <defaults>
</compile_context>

<pallas_src>
import jax
import jax.numpy as jnp
import numpy as np
from jax.experimental import pallas as pl
from jax.experimental.pallas import tpu as pltpu

_LANES = 128  # vreg lane width


# ----------------------------------------------------------------------------
# Primary path: aliased, zero-data-movement identity.
# ----------------------------------------------------------------------------
def _identity_alias_kernel(x_hbm_ref, o_hbm_ref):
    # The output HBM buffer is aliased to the input buffer, so the bits are
    # already in place; there is nothing to move.  `pltpu.touch` pins a fake
    # read/write dependence on the aliased output so the otherwise-empty
    # kernel keeps the buffer live and is not optimized away.
    del x_hbm_ref
    pltpu.touch(o_hbm_ref)


def _identity_inplace(x):
    """O(1) identity: alias the output to the input, no HBM/VMEM traffic."""
    return pl.pallas_call(
        _identity_alias_kernel,
        out_shape=jax.ShapeDtypeStruct(x.shape, x.dtype),
        in_specs=[pl.BlockSpec(memory_space=pl.ANY)],   # raw HBM ref, no auto-DMA
        out_specs=pl.BlockSpec(memory_space=pl.ANY),
        input_output_aliases={0: 0},
        compiler_params=pltpu.CompilerParams(has_side_effects=True),
    )(x)


# ----------------------------------------------------------------------------
# Fallback path: lane-dense tiled HBM->VMEM->HBM copy (near HBM roofline).
# ----------------------------------------------------------------------------
def _identity_copy_kernel(x_ref, o_ref):
    # Full-block, lane-dense, unmasked copy.
    o_ref[...] = x_ref[...]


def _block_bytes_and_vmem_limit():
    # v7x: ~3.2 TB/s HBM -> use fatter 8 MiB blocks so the ~0.35 us per-step
    # overhead stays at a few percent, and keep the scoped-VMEM limit under
    # its 64 MiB physical VMEM.  v5e/v6e: 4 MiB blocks are already ~85% of
    # roofline; 32 MiB explicit limit covers v5e's 16 MiB default.
    try:
        kind = jax.devices()[0].device_kind.lower()
    except Exception:  # pragma: no cover - defensive
        kind = ""
    if "v7" in kind:
        return 8 * 1024 * 1024, 48 * 1024 * 1024
    return 4 * 1024 * 1024, 32 * 1024 * 1024


def _choose_block_rows(rows, itemsize, block_bytes):
    max_rows = max(8, (block_bytes // (_LANES * itemsize)) // 8 * 8)
    if rows > max_rows:
        return max_rows  # multiple of 8 sublanes -> legal tiled block
    # Whole array would fit in one block.  For mid-size inputs (>= 1 MiB per
    # half) split into an even 2-step grid so the "parallel" axis can use both
    # v7x TensorCores and output writeback overlaps the next input DMA.
    half = rows // 2
    if half % 8 == 0 and half * _LANES * itemsize >= (1 << 20):
        return half
    return rows  # single full block (full-dim block is always legal)


def _identity_copy_2d(x2, block_bytes, vmem_limit):
    rows = x2.shape[0]
    block_rows = _choose_block_rows(rows, x2.dtype.itemsize, block_bytes)
    grid = (pl.cdiv(rows, block_rows),)
    return pl.pallas_call(
        _identity_copy_kernel,
        out_shape=jax.ShapeDtypeStruct((rows, _LANES), x2.dtype),
        grid_spec=pltpu.PrefetchScalarGridSpec(
            num_scalar_prefetch=0,
            grid=grid,
            in_specs=[pl.BlockSpec((block_rows, _LANES), lambda i: (i, 0))],
            out_specs=pl.BlockSpec((block_rows, _LANES), lambda i: (i, 0)),
        ),
        compiler_params=pltpu.CompilerParams(
            dimension_semantics=("parallel",),
            vmem_limit_bytes=vmem_limit,
        ),
    )(x2)


def _identity_copy(x):
    """Materialized-copy fallback: lane-dense (rows, 128) tiled copy."""
    orig_shape = x.shape
    total = x.size
    itemsize = x.dtype.itemsize
    block_bytes, vmem_limit = _block_bytes_and_vmem_limit()

    if total % _LANES == 0:
        out2 = _identity_copy_2d(
            x.reshape(total // _LANES, _LANES), block_bytes, vmem_limit
        )
        return out2.reshape(orig_shape)

    if total * itemsize <= (2 << 20):
        # Small ragged input: a single full-array block is cheap and legal.
        out2 = pl.pallas_call(
            _identity_copy_kernel,
            out_shape=jax.ShapeDtypeStruct((1, total), x.dtype),
            compiler_params=pltpu.CompilerParams(vmem_limit_bytes=vmem_limit),
        )(x.reshape(1, total))
        return out2.reshape(orig_shape)

    # Large ragged input: pad the flat view to a lane multiple and reuse the
    # tiled path so VMEM only ever holds one block at a time.
    # TODO(synk): pad only the <128-element tail (not the whole flat view) to
    # save one extra HBM pass on very large ragged inputs.
    pad = (-total) % _LANES
    flat = jnp.pad(x.reshape(-1), (0, pad))
    out2 = _identity_copy_2d(flat.reshape(-1, _LANES), block_bytes, vmem_limit)
    return out2.reshape(-1)[:total].reshape(orig_shape)


# ----------------------------------------------------------------------------
# Public entry point (matches Identity.forward: return x unchanged).
# ----------------------------------------------------------------------------
def identity(x):
    """Pallas implementation of nn.Identity's forward pass."""
    if x.size == 0:
        # Nothing to move; nn.Identity passes empty tensors straight through.
        return x
    try:
        return _identity_inplace(x)
    except Exception:
        # Conservative fallback if the aliased ANY-space no-op path does not
        # lower on this toolchain/chip: near-roofline tiled copy.
        return _identity_copy(x)


if __name__ == "__main__":
    # Small shape consistent with the module's forward (any tensor passes
    # through unchanged): batch=2, channels=4, spatial=16x16.
    key = jax.random.PRNGKey(0)
    x = jax.random.normal(key, (2, 4, 16, 16), jnp.float32)
    x_np = np.asarray(x)  # snapshot before the (possibly aliasing) call

    out = identity(x)
    out = jax.block_until_ready(out)

    assert out.shape == x_np.shape, (out.shape, x_np.shape)
    assert out.dtype == x_np.dtype, (out.dtype, x_np.dtype)
    assert np.array_equal(np.asarray(out), x_np)

    print("KERNEL_OK")
</pallas_src>

<mosaic_0001>
module attributes {stable_mosaic.version = 11 : i64} {
  func.func @_identity_alias_kernel(%arg0: memref<2x4x16x16xf32, #tpu.memory_space<any>>, %arg1: memref<2x4x16x16xf32, #tpu.memory_space<any>>) attributes {dimension_semantics = [], scalar_prefetch = 0 : i64, scratch_operands = 0 : i64, tpu.core_type = #tpu.core_type<tc>} {
    return
  }
}

module attributes {stable_mosaic.version = 11 : i64} {
  func.func @_identity_copy_kernel(%arg0: i32, %arg1: memref<16x128xf32, #tpu.memory_space<vmem>>, %arg2: memref<16x128xf32, #tpu.memory_space<vmem>>) attributes {dimension_semantics = [#tpu.dimension_semantics<parallel>], iteration_bounds = array<i64: 1>, scalar_prefetch = 0 : i64, scratch_operands = 0 : i64, tpu.core_type = #tpu.core_type<tc>, window_params = [{transform_indices = @transform_0, window_bounds = array<i64: 16, 128>}, {transform_indices = @transform_1, window_bounds = array<i64: 16, 128>}]} {
    %c0 = arith.constant 0 : index
    %c0_0 = arith.constant 0 : index
    %0 = vector.load %arg1[%c0, %c0_0] : memref<16x128xf32, #tpu.memory_space<vmem>>, vector<16x128xf32>
    %c0_1 = arith.constant 0 : index
    %c0_2 = arith.constant 0 : index
    %1 = vector.load %arg2[%c0_1, %c0_2] : memref<16x128xf32, #tpu.memory_space<vmem>>, vector<16x128xf32>
    tpu.vector_store %arg2[%c0_1, %c0_2], %0 {strides = array<i32>} : memref<16x128xf32, #tpu.memory_space<vmem>>, vector<16x128xf32>,
    return
  }
  func.func @transform_0(%arg0: i32) -> (i32, i32) {
    %c0_i32 = arith.constant 0 : i32
    %c0_i32_0 = arith.constant 0 : i32
    return %arg0, %c0_i32 : i32, i32
  }
  func.func @transform_1(%arg0: i32) -> (i32, i32) {
    %c0_i32 = arith.constant 0 : i32
    %c0_i32_0 = arith.constant 0 : i32
    return %arg0, %c0_i32 : i32, i32
  }
}

</mosaic_0001>

<llo_original>
// kernel: tpu_custom_call.1
$region0: #{tpu_custom_call.1}
  #allocation0 [shape = 'u32[]', space=smem, size = 0x4, offset = 0x4, fixed_abs, tag = 'smem constant byte address 0x4 - core index']
  #allocation1 [shape = 'u32[144,128]{1,0:T(1,128)}', space=vmem, size = 0x12000, scoped, tag = 'internal scratch']
  %s0 = inlined_call_operand.hbm [shape: f32[2,4,16,16], index: 0, kind: input, shape index: {}, may-alias: {0,1}]
  %s1 = inlined_call_operand.hbm [shape: f32[2,4,16,16], index: 1, kind: output, shape index: {}, may-alias: {0,1}]
  %s2 = sld [smem:[#allocation0]]
  $region2: #{tpu_custom_call.1} parent=0
    _
  %s4 = ssub.s32 1, %s2
  %s5 = scalar_select 0, %s4, %s2

// kernel: tpu_custom_call.1
$region0: #{tpu_custom_call.1}
  #allocation0 [shape = 'u32[]', space=smem, size = 0x4, offset = 0x4, fixed_abs, tag = 'smem constant byte address 0x4 - core index']
  #allocation1 [shape = 'u32[144,128]{1,0:T(1,128)}', space=vmem, size = 0x12000, scoped, tag = 'internal scratch']
  %s0 = inlined_call_operand.hbm [shape: f32[16,128], index: 0, kind: input, shape index: {}]
  %s1 = inlined_call_operand.hbm [shape: f32[16,128], index: 1, kind: output, shape index: {}]
  %s2 = sld [smem:[#allocation0]]
  $region18: #{tpu_custom_call.1} parent=0
    _
  %s4 = ssub.s32 1, %s2
  %s5 = scalar_select 0, %s4, %s2
  $region1: #{tpu_custom_call.1} parent=0
    #allocation2 [shape = 'u8[8192]{0}', space=vmem, size = 0x2000, scoped, tag = 'input window, operand 0, single buffered']
    #allocation3 [shape = 's32[1]{0}', space=sflag, size = 0x4, scoped, tag = 'scoped memory for tpu_custom_call.1']
    #allocation4 [shape = 's32[1]{0}', space=sflag, size = 0x4, scoped, tag = 'scoped memory for tpu_custom_call.1']
    #allocation5 [shape = 'u8[8192]{0}', space=vmem, size = 0x2000, scoped, tag = 'output window, operand 0, single buffered']
    %6 = vsyncpa [#allocation3], 0
    %7 = vsyncpa [#allocation4], 0
    // Predicated region
    $region2: #{tpu_custom_call.1} parent=1 // pred_check
      _
    $region3: #{tpu_custom_call.1} parent=1 // pred_check_branch
      %9 = sbr.rel (0) target = $region5
    $region4: #{tpu_custom_call.1} parent=1 // pred_region
      %s11 = ssub.s32 256, 256
      %12 = vsyncadd [#allocation3], %s11
      %s13 = sshll.u32 [#allocation2], 4
      %s14 = int_to_ptr.vmem [resolvable:$true] %s13
      %19 = dma.hbm_to_vmem [thread:$0]  %s0, 256, %s14, [#allocation3], 128, 128, 8
    $region5: #{tpu_custom_call.1} parent=1 // pred_fallthru
      _
    // Predicated region
    $region6: #{tpu_custom_call.1} parent=1 // pred_check
      _
    $region7: #{tpu_custom_call.1} parent=1 // pred_check_branch
      %21 = sbr.rel (0) target = $region9
    $region8: #{tpu_custom_call.1} parent=1 // pred_region
      %22 = dma.done [#allocation3], 256
    $region9: #{tpu_custom_call.1} parent=1 // pred_fallthru
      _
    %v23 = vld [vmem:[#allocation2] sm:$0xff]
    %v24 = vld [vmem:[#allocation2 + $0x8] sm:$0xff]
    %25 = vst [vmem:[#allocation5] sm:$0xff] %v23
    %26 = vst [vmem:[#allocation5 + $0x8] sm:$0xff] %v24
    // Predicated region
    $region10: #{tpu_custom_call.1} parent=1 // pred_check
      _
    $region11: #{tpu_custom_call.1} parent=1 // pred_check_branch
      %28 = sbr.rel (0) target = $region13
    $region12: #{tpu_custom_call.1} parent=1 // pred_region
      %s30 = ssub.s32 256, 256
      %31 = vsyncadd [#allocation4], %s30
      %s32 = sshll.u32 [#allocation5], 4
      %s33 = int_to_ptr.vmem [resolvable:$true] %s32
      %38 = dma.vmem_to_hbm [thread:$0]  %s33, 256, %s1, [#allocation4], 128, 128, 8
    $region13: #{tpu_custom_call.1} parent=1 // pred_fallthru
      _
    // Predicated region
    $region14: #{tpu_custom_call.1} parent=1 // pred_check
      _
    $region15: #{tpu_custom_call.1} parent=1 // pred_check_branch
      %40 = sbr.rel (0) target = $region17
    $region16: #{tpu_custom_call.1} parent=1 // pred_region
      %41 = dma.done [#allocation4], 256
    $region17: #{tpu_custom_call.1} parent=1 // pred_fallthru
      _
    %42 = vsyncpa [#allocation3], 1
    %43 = vsyncpa [#allocation4], 1

</llo_original>
